<compile_context>
chip_gen: v7x
topology: tpu7x:2x2x1
jax: 0.10.0
libtpu: 0.0.40
codegen_flags: <defaults>
</compile_context>

<pallas_src>
import functools

import jax
import jax.numpy as jnp
from jax.experimental import pallas as pl
from jax.experimental.pallas import tpu as pltpu

LN_EPS = 1e-5
LEAKY_SLOPE = 0.01


def _round_up(x, m):
    return (x + m - 1) // m * m


# --------------------------------------------------------------------------------------
# Kernel: whole MLP stack for one batch tile.
# --------------------------------------------------------------------------------------
def _mlp_stack_kernel(*refs, layer_dims, use_layer_norm, use_activation):
    """refs = (x_ref, w_0, b_0, ..., w_{L-1}, b_{L-1}, o_ref).

    x_ref : (TB, kp_0)    bf16   batch tile (pipelined)
    w_l   : (kp_l, np_l)  bf16   (n_in, n_out) layout, zero padded, resident in VMEM
    b_l   : (1,  np_l)    f32    zero padded, resident in VMEM
    o_ref : (TB, np_last) f32
    """
    x_ref = refs[0]
    o_ref = refs[-1]
    wb_refs = refs[1:-1]
    L = len(layer_dims)

    h = x_ref[...]                                              # bf16 carry (TB, kp_0)
    for l, (n_in, n_out) in enumerate(layer_dims):              # static unroll over layers
        w_ref = wb_refs[2 * l]
        b_ref = wb_refs[2 * l + 1]
        np_l = w_ref.shape[1]                                   # padded n_out (static)

        # Linear: bf16 operands on the MXU, f32 accumulation, no in-kernel transpose.
        z = jnp.dot(h, w_ref[...], preferred_element_type=jnp.float32)
        z = z + b_ref[...]                                      # (TB, np_l) f32

        if use_layer_norm:
            inv_n = 1.0 / float(n_out)
            # Padded columns of z are exactly 0 -> full-width sum / true n_out is exact.
            mean = jnp.sum(z, axis=-1, keepdims=True) * inv_n
            d = z - mean
            if np_l != n_out:
                # Two-pass variance: padded columns become -mean, mask them out.
                col = jax.lax.broadcasted_iota(jnp.int32, (1, np_l), 1)
                d = jnp.where(col < n_out, d, 0.0)
            var = jnp.sum(d * d, axis=-1, keepdims=True) * inv_n
            z = (z - mean) * jax.lax.rsqrt(var + LN_EPS)

        if use_activation:
            z = jnp.maximum(z, LEAKY_SLOPE * z)                 # LeakyReLU (slope < 1)

        if l + 1 < L:
            h = z.astype(jnp.bfloat16)   # bf16 inter-layer carry (== pre-matmul cast before)
        else:
            o_ref[...] = z.astype(o_ref.dtype)


# --------------------------------------------------------------------------------------
# Parameter packing: pad n_in / n_out independently per layer to multiples of 128,
# transpose to (n_in, n_out), cast weights to bf16 (one-time cost in the wrapper).
# --------------------------------------------------------------------------------------
def pack_mlp_params(params):
    packed = []
    layer_dims = []
    for (w, b) in params:
        n_out, n_in = int(w.shape[0]), int(w.shape[1])
        kp = _round_up(n_in, 128)
        npad = _round_up(n_out, 128)
        wp = jnp.zeros((kp, npad), jnp.float32).at[:n_in, :n_out].set(w.T)  # (n_in, n_out)
        bp = jnp.zeros((1, npad), jnp.float32).at[0, :n_out].set(b.reshape(-1))
        packed.append((wp.astype(jnp.bfloat16), bp))
        layer_dims.append((n_in, n_out))
    # Chain consistency: padded n_out of layer l == padded n_in of layer l+1.
    for l in range(len(layer_dims) - 1):
        assert _round_up(layer_dims[l][1], 128) == _round_up(layer_dims[l + 1][0], 128)
    return packed, tuple(layer_dims)


# --------------------------------------------------------------------------------------
# Wrapper
# --------------------------------------------------------------------------------------
def mlp_forward(params, x, *, normalization="layer", batch_tile=512):
    """Fused forward pass of MLP / FCLayers (eval mode) as a single Pallas kernel."""
    packed, layer_dims = pack_mlp_params(params)
    L = len(packed)
    kp0 = packed[0][0].shape[0]
    np_last = packed[-1][0].shape[1]
    n_output = layer_dims[-1][1]
    batch, n_in = x.shape

    # Batch tiling: rows multiple of 8; cap the tile so the grid has >=2 steps whenever
    # possible (megacore sharding on v7x). batch_tile bounds the per-step VMEM footprint.
    rows8 = _round_up(batch, 8)
    TB = min(batch_tile, rows8)
    if rows8 >= 16:
        TB = min(TB, _round_up(pl.cdiv(rows8, 2), 8))
    TB = max(TB, 8)
    padded_batch = _round_up(batch, TB)

    # bf16 activation input (halves HBM->VMEM DMA); zero-padded to the batch tile / lane grid.
    x_pad = jnp.zeros((padded_batch, kp0), jnp.bfloat16).at[:batch, :n_in].set(
        x.astype(jnp.bfloat16))

    kernel = functools.partial(
        _mlp_stack_kernel,
        layer_dims=layer_dims,
        use_layer_norm=(normalization == "layer"),
        use_activation=True,
    )

    # Weights / biases: whole arrays resident in VMEM for the entire grid (single buffer,
    # no per-step DMA — they are grid-invariant).
    wb_specs = []
    wb_args = []
    for (wp, bp) in packed:
        wb_specs.append(pl.BlockSpec(memory_space=pltpu.MemorySpace.VMEM))
        wb_specs.append(pl.BlockSpec(memory_space=pltpu.MemorySpace.VMEM))
        wb_args.extend([wp, bp])

    # Cost estimate with true per-layer padded dims; weight bytes counted once.
    mm_flops = 2 * padded_batch * sum(wp.shape[0] * wp.shape[1] for wp, _ in packed)
    ln_flops = 8 * padded_batch * sum(wp.shape[1] for wp, _ in packed)
    weight_bytes = sum(wp.size * 2 + bp.size * 4 for wp, bp in packed)
    bytes_accessed = x_pad.size * 2 + weight_bytes + padded_batch * np_last * 4

    # Explicit VMEM budget: resident weights + double-buffered activation tiles +
    # f32 intermediates, with headroom; clamped to v7x's 64 MiB ceiling.
    max_np = max(wp.shape[1] for wp, _ in packed)
    vmem_needed = (weight_bytes
                   + 2 * TB * kp0 * 2          # input tile, bf16, double buffered
                   + 2 * TB * np_last * 4      # output tile, f32, double buffered
                   + 6 * TB * max_np * 4       # in-kernel f32 intermediates
                   + (2 << 20))                # margin
    vmem_limit = int(min(max(vmem_needed, 32 << 20), 64 << 20))

    out = pl.pallas_call(
        kernel,
        out_shape=jax.ShapeDtypeStruct((padded_batch, np_last), jnp.float32),
        grid_spec=pltpu.PrefetchScalarGridSpec(
            num_scalar_prefetch=0,
            grid=(padded_batch // TB,),
            in_specs=[pl.BlockSpec((TB, kp0), lambda i: (i, 0))] + wb_specs,
            out_specs=pl.BlockSpec((TB, np_last), lambda i: (i, 0)),
        ),
        compiler_params=pltpu.CompilerParams(
            dimension_semantics=("parallel",),                  # megacore sharding on v7x
            vmem_limit_bytes=vmem_limit,
        ),
        cost_estimate=pl.CostEstimate(
            flops=mm_flops + ln_flops,
            transcendentals=padded_batch * L,                   # rsqrt per row per layer
            bytes_accessed=bytes_accessed,
        ),
    )(x_pad, *wb_args)

    return out[:batch, :n_output]


# --------------------------------------------------------------------------------------
# Deterministic parameter init matching FCLayers' layer dimensions.
#   layers_dim = [n_input] + (n_layers - 1) * [n_hidden] + [n_output]
# --------------------------------------------------------------------------------------
def init_mlp_params(key, n_input, n_output, n_layers=1, n_hidden=128):
    layers_dim = [n_input] + (n_layers - 1) * [n_hidden] + [n_output]
    params = []
    for n_in, n_out in zip(layers_dim[:-1], layers_dim[1:]):
        key, kw, kb = jax.random.split(key, 3)
        bound = 1.0 / jnp.sqrt(jnp.float32(n_in))   # ~ PyTorch nn.Linear default range
        w = jax.random.uniform(kw, (n_out, n_in), jnp.float32, -bound, bound)
        b = jax.random.uniform(kb, (1, n_out), jnp.float32, -bound, bound)
        params.append((w, b))
    return params


if __name__ == "__main__":
    # Small, module-consistent shapes: x is a batch of feature vectors (batch, n_input).
    batch, n_input, n_hidden, n_output, n_layers = 8, 32, 128, 64, 2

    key = jax.random.PRNGKey(0)
    key, kx = jax.random.split(key)
    x = jax.random.normal(kx, (batch, n_input), jnp.float32)

    params = init_mlp_params(key, n_input, n_output, n_layers=n_layers, n_hidden=n_hidden)

    out = mlp_forward(params, x, normalization="layer")
    out = jax.block_until_ready(out)

    # Pure-JAX reference of the same math (bf16 MXU operands, f32 LN/activation).
    ref = x
    for (w, b) in params:
        h = jnp.dot(ref.astype(jnp.bfloat16), w.T.astype(jnp.bfloat16),
                    preferred_element_type=jnp.float32) + b.reshape(-1)
        mu = h.mean(-1, keepdims=True)
        var = ((h - mu) ** 2).mean(-1, keepdims=True)
        h = (h - mu) * jax.lax.rsqrt(var + LN_EPS)
        ref = jnp.maximum(h, LEAKY_SLOPE * h)

    assert out.shape == (batch, n_output)
    assert jnp.allclose(out, ref, atol=1e-4, rtol=1e-4), float(jnp.max(jnp.abs(out - ref)))

    print("KERNEL_OK")
</pallas_src>

<mosaic_0001>
module attributes {stable_mosaic.version = 11 : i64} {
  func.func @_mlp_stack_kernel(%arg0: i32, %arg1: memref<8x128xbf16, #tpu.memory_space<vmem>>, %arg2: memref<128x128xbf16, #tpu.memory_space<vmem>>, %arg3: memref<1x128xf32, #tpu.memory_space<vmem>>, %arg4: memref<128x128xbf16, #tpu.memory_space<vmem>>, %arg5: memref<1x128xf32, #tpu.memory_space<vmem>>, %arg6: memref<8x128xf32, #tpu.memory_space<vmem>>) attributes {dimension_semantics = [#tpu.dimension_semantics<parallel>], iteration_bounds = array<i64: 1>, scalar_prefetch = 0 : i64, scratch_operands = 0 : i64, tpu.core_type = #tpu.core_type<tc>, window_params = [{transform_indices = @transform_0, window_bounds = array<i64: 8, 128>}, {pipeline_mode = #tpu.pipeline_mode<synchronous>, transform_indices = @transform_1, window_bounds = array<i64: 128, 128>}, {pipeline_mode = #tpu.pipeline_mode<synchronous>, transform_indices = @transform_2, window_bounds = array<i64: 1, 128>}, {pipeline_mode = #tpu.pipeline_mode<synchronous>, transform_indices = @transform_3, window_bounds = array<i64: 128, 128>}, {pipeline_mode = #tpu.pipeline_mode<synchronous>, transform_indices = @transform_4, window_bounds = array<i64: 1, 128>}, {transform_indices = @transform_5, window_bounds = array<i64: 8, 128>}]} {
    %c0 = arith.constant 0 : index
    %c0_0 = arith.constant 0 : index
    %0 = vector.load %arg1[%c0, %c0_0] : memref<8x128xbf16, #tpu.memory_space<vmem>>, vector<8x128xbf16>
    %c0_1 = arith.constant 0 : index
    %c0_2 = arith.constant 0 : index
    %1 = vector.load %arg2[%c0_1, %c0_2] : memref<128x128xbf16, #tpu.memory_space<vmem>>, vector<128x128xbf16>
    %cst = arith.constant dense<0.000000e+00> : vector<8x128xf32>
    %2 = tpu.matmul %0, %1, %cst {dimension_numbers = #tpu.dot_dimension_numbers<[1], [0], [0], [1], [0, 0, 1, 1], [], []>} : vector<8x128xbf16>, vector<128x128xbf16>, vector<8x128xf32> -> vector<8x128xf32>
    %c0_3 = arith.constant 0 : index
    %c0_4 = arith.constant 0 : index
    %3 = vector.load %arg3[%c0_3, %c0_4] : memref<1x128xf32, #tpu.memory_space<vmem>>, vector<1x128xf32>
    %4 = vector.broadcast %3 : vector<1x128xf32> to vector<8x128xf32>
    %5 = arith.addf %2, %4 : vector<8x128xf32>
    %cst_5 = arith.constant dense<0.000000e+00> : vector<8xf32>
    %6 = vector.multi_reduction <add>, %5, %cst_5 [1] : vector<8x128xf32> to vector<8xf32>
    %7 = vector.shape_cast %6 : vector<8xf32> to vector<8x1xf32>
    %cst_6 = arith.constant 7.812500e-03 : f32
    %8 = vector.broadcast %cst_6 : f32 to vector<8x1xf32>
    %9 = arith.mulf %7, %8 : vector<8x1xf32>
    %10 = vector.broadcast %9 : vector<8x1xf32> to vector<8x128xf32>
    %11 = arith.subf %5, %10 : vector<8x128xf32>
    %12 = arith.mulf %11, %11 : vector<8x128xf32>
    %cst_7 = arith.constant dense<0.000000e+00> : vector<8xf32>
    %13 = vector.multi_reduction <add>, %12, %cst_7 [1] : vector<8x128xf32> to vector<8xf32>
    %14 = vector.shape_cast %13 : vector<8xf32> to vector<8x1xf32>
    %cst_8 = arith.constant 7.812500e-03 : f32
    %15 = vector.broadcast %cst_8 : f32 to vector<8x1xf32>
    %16 = arith.mulf %14, %15 : vector<8x1xf32>
    %17 = vector.broadcast %9 : vector<8x1xf32> to vector<8x128xf32>
    %18 = arith.subf %5, %17 : vector<8x128xf32>
    %cst_9 = arith.constant 9.99999974E-6 : f32
    %19 = vector.broadcast %cst_9 : f32 to vector<8x1xf32>
    %20 = arith.addf %16, %19 : vector<8x1xf32>
    %21 = math.rsqrt %20 : vector<8x1xf32>
    %22 = vector.broadcast %21 : vector<8x1xf32> to vector<8x128xf32>
    %23 = arith.mulf %18, %22 : vector<8x128xf32>
    %cst_10 = arith.constant 0.00999999977 : f32
    %24 = vector.broadcast %cst_10 : f32 to vector<8x128xf32>
    %25 = arith.mulf %24, %23 : vector<8x128xf32>
    %26 = arith.maximumf %23, %25 : vector<8x128xf32>
    %27 = arith.truncf %26 : vector<8x128xf32> to vector<8x128xbf16>
    %c0_11 = arith.constant 0 : index
    %c0_12 = arith.constant 0 : index
    %28 = vector.load %arg4[%c0_11, %c0_12] : memref<128x128xbf16, #tpu.memory_space<vmem>>, vector<128x128xbf16>
    %cst_13 = arith.constant dense<0.000000e+00> : vector<8x128xf32>
    %29 = tpu.matmul %27, %28, %cst_13 {dimension_numbers = #tpu.dot_dimension_numbers<[1], [0], [0], [1], [0, 0, 1, 1], [], []>} : vector<8x128xbf16>, vector<128x128xbf16>, vector<8x128xf32> -> vector<8x128xf32>
    %c0_14 = arith.constant 0 : index
    %c0_15 = arith.constant 0 : index
    %30 = vector.load %arg5[%c0_14, %c0_15] : memref<1x128xf32, #tpu.memory_space<vmem>>, vector<1x128xf32>
    %31 = vector.broadcast %30 : vector<1x128xf32> to vector<8x128xf32>
    %32 = arith.addf %29, %31 : vector<8x128xf32>
    %cst_16 = arith.constant dense<0.000000e+00> : vector<8xf32>
    %33 = vector.multi_reduction <add>, %32, %cst_16 [1] : vector<8x128xf32> to vector<8xf32>
    %34 = vector.shape_cast %33 : vector<8xf32> to vector<8x1xf32>
    %cst_17 = arith.constant 1.562500e-02 : f32
    %35 = vector.broadcast %cst_17 : f32 to vector<8x1xf32>
    %36 = arith.mulf %34, %35 : vector<8x1xf32>
    %37 = vector.broadcast %36 : vector<8x1xf32> to vector<8x128xf32>
    %38 = arith.subf %32, %37 : vector<8x128xf32>
    %39 = tpu.iota {dimensions = array<i32: 1>} : vector<1x128xi32>
    %c64_i32 = arith.constant 64 : i32
    %40 = vector.broadcast %c64_i32 : i32 to vector<1x128xi32>
    %41 = arith.cmpi slt, %39, %40 : vector<1x128xi32>
    %cst_18 = arith.constant 0.000000e+00 : f32
    %42 = vector.shape_cast %41 : vector<1x128xi1> to vector<1x128xi1>
    %43 = vector.broadcast %42 : vector<1x128xi1> to vector<8x128xi1>
    %44 = vector.broadcast %cst_18 : f32 to vector<8x128xf32>
    %45 = arith.select %43, %38, %44 : vector<8x128xi1>, vector<8x128xf32>
    %46 = arith.mulf %45, %45 : vector<8x128xf32>
    %cst_19 = arith.constant dense<0.000000e+00> : vector<8xf32>
    %47 = vector.multi_reduction <add>, %46, %cst_19 [1] : vector<8x128xf32> to vector<8xf32>
    %48 = vector.shape_cast %47 : vector<8xf32> to vector<8x1xf32>
    %cst_20 = arith.constant 1.562500e-02 : f32
    %49 = vector.broadcast %cst_20 : f32 to vector<8x1xf32>
    %50 = arith.mulf %48, %49 : vector<8x1xf32>
    %51 = vector.broadcast %36 : vector<8x1xf32> to vector<8x128xf32>
    %52 = arith.subf %32, %51 : vector<8x128xf32>
    %cst_21 = arith.constant 9.99999974E-6 : f32
    %53 = vector.broadcast %cst_21 : f32 to vector<8x1xf32>
    %54 = arith.addf %50, %53 : vector<8x1xf32>
    %55 = math.rsqrt %54 : vector<8x1xf32>
    %56 = vector.broadcast %55 : vector<8x1xf32> to vector<8x128xf32>
    %57 = arith.mulf %52, %56 : vector<8x128xf32>
    %cst_22 = arith.constant 0.00999999977 : f32
    %58 = vector.broadcast %cst_22 : f32 to vector<8x128xf32>
    %59 = arith.mulf %58, %57 : vector<8x128xf32>
    %60 = arith.maximumf %57, %59 : vector<8x128xf32>
    %c0_23 = arith.constant 0 : index
    %c0_24 = arith.constant 0 : index
    %61 = vector.load %arg6[%c0_23, %c0_24] : memref<8x128xf32, #tpu.memory_space<vmem>>, vector<8x128xf32>
    tpu.vector_store %arg6[%c0_23, %c0_24], %60 {strides = array<i32>} : memref<8x128xf32, #tpu.memory_space<vmem>>, vector<8x128xf32>,
    return
  }
  func.func @transform_0(%arg0: i32) -> (i32, i32) {
    %c0_i32 = arith.constant 0 : i32
    %c0_i32_0 = arith.constant 0 : i32
    return %arg0, %c0_i32 : i32, i32
  }
  func.func @transform_1(%arg0: i32) -> (i32, i32) {
    %c0_i32 = arith.constant 0 : i32
    %c0_i32_0 = arith.constant 0 : i32
    %c0_i32_1 = arith.constant 0 : i32
    return %c0_i32, %c0_i32_0 : i32, i32
  }
  func.func @transform_2(%arg0: i32) -> (i32, i32) {
    %c0_i32 = arith.constant 0 : i32
    %c0_i32_0 = arith.constant 0 : i32
    %c0_i32_1 = arith.constant 0 : i32
    return %c0_i32, %c0_i32_0 : i32, i32
  }
  func.func @transform_3(%arg0: i32) -> (i32, i32) {
    %c0_i32 = arith.constant 0 : i32
    %c0_i32_0 = arith.constant 0 : i32
    %c0_i32_1 = arith.constant 0 : i32
    return %c0_i32, %c0_i32_0 : i32, i32
  }
  func.func @transform_4(%arg0: i32) -> (i32, i32) {
    %c0_i32 = arith.constant 0 : i32
    %c0_i32_0 = arith.constant 0 : i32
    %c0_i32_1 = arith.constant 0 : i32
    return %c0_i32, %c0_i32_0 : i32, i32
  }
  func.func @transform_5(%arg0: i32) -> (i32, i32) {
    %c0_i32 = arith.constant 0 : i32
    %c0_i32_0 = arith.constant 0 : i32
    return %arg0, %c0_i32 : i32, i32
  }
}

</mosaic_0001>

<llo_original>
// kernel: tpu_custom_call.1
$region0: #{tpu_custom_call.1}
  #allocation0 [shape = 'u32[]', space=smem, size = 0x4, offset = 0x4, fixed_abs, tag = 'smem constant byte address 0x4 - core index']
  #allocation1 [shape = 'u32[144,128]{1,0:T(1,128)}', space=vmem, size = 0x12000, scoped, tag = 'internal scratch']
  %s0 = inlined_call_operand.hbm [shape: bf16[8,128], index: 0, kind: input, shape index: {}]
  %s1 = inlined_call_operand.hbm [shape: bf16[128,128], index: 1, kind: input, shape index: {}]
  %s2 = inlined_call_operand.vmem [shape: f32[1,128], index: 2, kind: input, shape index: {}]
  %s3 = inlined_call_operand.hbm [shape: bf16[128,128], index: 3, kind: input, shape index: {}]
  %s4 = inlined_call_operand.vmem [shape: f32[1,128], index: 4, kind: input, shape index: {}]
  %s5 = inlined_call_operand.hbm [shape: f32[8,128], index: 5, kind: output, shape index: {}]
  %s6 = sld [smem:[#allocation0]]
  $region42: #{tpu_custom_call.1} parent=0
    _
  %s8 = ssub.s32 1, %s6
  %s9 = scalar_select 0, %s8, %s6
  $region1: #{tpu_custom_call.1} parent=0
    #allocation2 [shape = 'u8[2048]{0}', space=vmem, size = 0x800, scoped, tag = 'input window, operand 0, single buffered']
    #allocation3 [shape = 's32[1]{0}', space=sflag, size = 0x4, scoped, tag = 'scoped memory for tpu_custom_call.1']
    #allocation4 [shape = 's32[1]{0}', space=sflag, size = 0x4, scoped, tag = 'scoped memory for tpu_custom_call.1']
    #allocation5 [shape = 'u8[32768]{0}', space=vmem, size = 0x8000, scoped, tag = 'input window, operand 1, single buffered']
    #allocation6 [shape = 's32[1]{0}', space=sflag, size = 0x4, scoped, tag = 'scoped memory for tpu_custom_call.1']
    #allocation7 [shape = 'u8[32768]{0}', space=vmem, size = 0x8000, scoped, tag = 'input window, operand 3, single buffered']
    #allocation8 [shape = 'u8[4096]{0}', space=vmem, size = 0x1000, scoped, tag = 'output window, operand 0, single buffered']
    %10 = vsyncpa [#allocation3], 0
    %11 = vsyncpa [#allocation6], 0
    %12 = vsyncpa [#allocation4], 0
    // Predicated region
    $region2: #{tpu_custom_call.1} parent=1 // pred_check
      _
    $region3: #{tpu_custom_call.1} parent=1 // pred_check_branch
      %14 = sbr.rel (0) target = $region5
    $region4: #{tpu_custom_call.1} parent=1 // pred_region
      %s16 = ssub.s32 64, 64
      %17 = vsyncadd [#allocation3], %s16
      %s19 = sshll.u32 [#allocation2], 4
      %s20 = int_to_ptr.vmem [resolvable:$true] %s19
      %22 = dma.hbm_to_vmem [thread:$0]  %s0, 64, %s20, [#allocation3]
    $region5: #{tpu_custom_call.1} parent=1 // pred_fallthru
      _
    // Predicated region
    $region6: #{tpu_custom_call.1} parent=1 // pred_check
      _
    $region7: #{tpu_custom_call.1} parent=1 // pred_check_branch
      %24 = sbr.rel (0) target = $region9
    $region8: #{tpu_custom_call.1} parent=1 // pred_region
      %s26 = ssub.s32 1024, 1024
      %27 = vsyncadd [#allocation6], %s26
      %s28 = sshll.u32 [#allocation5], 4
      %s29 = int_to_ptr.vmem [resolvable:$true] %s28
      %34 = dma.hbm_to_vmem [thread:$0]  %s1, 1024, %s29, [#allocation6], 64, 64, 4
    $region9: #{tpu_custom_call.1} parent=1 // pred_fallthru
      _
    // Predicated region
    $region10: #{tpu_custom_call.1} parent=1 // pred_check
      _
    $region11: #{tpu_custom_call.1} parent=1 // pred_check_branch
      %36 = sbr.rel (0) target = $region13
    $region12: #{tpu_custom_call.1} parent=1 // pred_region
      _
    $region13: #{tpu_custom_call.1} parent=1 // pred_fallthru
      _
    // Predicated region
    $region14: #{tpu_custom_call.1} parent=1 // pred_check
      _
    $region15: #{tpu_custom_call.1} parent=1 // pred_check_branch
      %38 = sbr.rel (0) target = $region17
    $region16: #{tpu_custom_call.1} parent=1 // pred_region
      %s40 = ssub.s32 1024, 1024
      %41 = vsyncadd [#allocation6], %s40
      %s42 = sshll.u32 [#allocation7], 4
      %s43 = int_to_ptr.vmem [resolvable:$true] %s42
      %48 = dma.hbm_to_vmem [thread:$0]  %s3, 1024, %s43, [#allocation6], 64, 64, 4
    $region17: #{tpu_custom_call.1} parent=1 // pred_fallthru
      _
    // Predicated region
    $region18: #{tpu_custom_call.1} parent=1 // pred_check
      _
    $region19: #{tpu_custom_call.1} parent=1 // pred_check_branch
      %50 = sbr.rel (0) target = $region21
    $region20: #{tpu_custom_call.1} parent=1 // pred_region
      _
    $region21: #{tpu_custom_call.1} parent=1 // pred_fallthru
      _
    // Predicated region
    $region22: #{tpu_custom_call.1} parent=1 // pred_check
      _
    $region23: #{tpu_custom_call.1} parent=1 // pred_check_branch
      %52 = sbr.rel (0) target = $region25
    $region24: #{tpu_custom_call.1} parent=1 // pred_region
      %53 = dma.done [#allocation3], 64
    $region25: #{tpu_custom_call.1} parent=1 // pred_fallthru
      _
    // Predicated region
    $region26: #{tpu_custom_call.1} parent=1 // pred_check
      _
    $region27: #{tpu_custom_call.1} parent=1 // pred_check_branch
      %55 = sbr.rel (0) target = $region29
    $region28: #{tpu_custom_call.1} parent=1 // pred_region
      %56 = dma.done [#allocation6], 1024
    $region29: #{tpu_custom_call.1} parent=1 // pred_fallthru
      _
    // Predicated region
    $region30: #{tpu_custom_call.1} parent=1 // pred_check
      _
    $region31: #{tpu_custom_call.1} parent=1 // pred_check_branch
      %58 = sbr.rel (0) target = $region33
    $region32: #{tpu_custom_call.1} parent=1 // pred_region
      %59 = dma.done [#allocation6], 1024
    $region33: #{tpu_custom_call.1} parent=1 // pred_fallthru
      _
    %v61 = vld [vmem:[#allocation2] sm:$0xf]
    %v62 = vld [vmem:[#allocation5] sm:$0xf]
    %v63 = vld [vmem:[#allocation5 + $0x4] sm:$0xf]
    %v64 = vld [vmem:[#allocation5 + $0x8] sm:$0xf]
    %v65 = vld [vmem:[#allocation5 + $0xc] sm:$0xf]
    %v66 = vld [vmem:[#allocation5 + $0x10] sm:$0xf]
    %v67 = vld [vmem:[#allocation5 + $0x14] sm:$0xf]
    %v68 = vld [vmem:[#allocation5 + $0x18] sm:$0xf]
    %v69 = vld [vmem:[#allocation5 + $0x1c] sm:$0xf]
    %v70 = vld [vmem:[#allocation5 + $0x20] sm:$0xf]
    %v71 = vld [vmem:[#allocation5 + $0x24] sm:$0xf]
    %v72 = vld [vmem:[#allocation5 + $0x28] sm:$0xf]
    %v73 = vld [vmem:[#allocation5 + $0x2c] sm:$0xf]
    %v74 = vld [vmem:[#allocation5 + $0x30] sm:$0xf]
    %v75 = vld [vmem:[#allocation5 + $0x34] sm:$0xf]
    %v76 = vld [vmem:[#allocation5 + $0x38] sm:$0xf]
    %v77 = vld [vmem:[#allocation5 + $0x3c] sm:$0xf]
    %v78 = vld [vmem:[%s2] sm:$0x1]
    %v80 = vlaneseq
    %v81 = vshrl.u32 %v80, 7
    %v82 = vsub.s32 0, %v81
    %v83 = vrot.slane %v78, %v82
    %v101 = vunpack.c.l.b16 %v62
    %v102 = vunpack.c.l.b16 %v63
    %v103 = vunpack.c.l.b16 %v64
    %v104 = vunpack.c.l.b16 %v65
    %v105 = vunpack.c.l.b16 %v66
    %v106 = vunpack.c.l.b16 %v67
    %v107 = vunpack.c.l.b16 %v68
    %v108 = vunpack.c.l.b16 %v69
    %v109 = vunpack.c.l.b16 %v70
    %v110 = vunpack.c.l.b16 %v71
    %v111 = vunpack.c.l.b16 %v72
    %v112 = vunpack.c.l.b16 %v73
    %v113 = vunpack.c.l.b16 %v74
    %v114 = vunpack.c.l.b16 %v75
    %v115 = vunpack.c.l.b16 %v76
    %v116 = vunpack.c.l.b16 %v77
    %v117 = vpack.c.b16 %v102, %v101
    %v118 = vpack.c.b16 %v104, %v103
    %v119 = vpack.c.b16 %v106, %v105
    %v120 = vpack.c.b16 %v108, %v107
    %v121 = vpack.c.b16 %v110, %v109
    %v122 = vpack.c.b16 %v112, %v111
    %v123 = vpack.c.b16 %v114, %v113
    %v124 = vpack.c.b16 %v116, %v115
    %133 = vmatprep.subr.bf16.mxu0 0
    %134 = vmatpush1.bf16.msra.mxu0 %v117
    %135 = vmatprep.subr.bf16.mxu0 0
    %136 = vmatpush1.bf16.msra.mxu0 %v118
    %137 = vmatprep.subr.bf16.mxu0 0
    %138 = vmatpush1.bf16.msra.mxu0 %v119
    %139 = vmatprep.subr.bf16.mxu0 0
    %140 = vmatpush1.bf16.msra.mxu0 %v120
    %141 = vmatprep.subr.bf16.mxu0 0
    %142 = vmatpush1.bf16.msra.mxu0 %v121
    %143 = vmatprep.subr.bf16.mxu0 0
    %144 = vmatpush1.bf16.msra.mxu0 %v122
    %145 = vmatprep.subr.bf16.mxu0 0
    %146 = vmatpush1.bf16.msra.mxu0 %v123
    %147 = vmatprep.subr.bf16.mxu0 0
    %148 = vmatpush1.bf16.msra.mxu0 %v124
    %149 = vmatprep.subr.bf16.mxu0 0
    %150 = vmatpush1.bf16.msra.mxu0 0
    %151 = vmatprep.subr.bf16.mxu0 0
    %152 = vmatpush1.bf16.msra.mxu0 0
    %153 = vmatprep.subr.bf16.mxu0 0
    %154 = vmatpush1.bf16.msra.mxu0 0
    %155 = vmatprep.subr.bf16.mxu0 0
    %156 = vmatpush1.bf16.msra.mxu0 0
    %157 = vmatprep.subr.bf16.mxu0 0
    %158 = vmatpush1.bf16.msra.mxu0 0
    %159 = vmatprep.subr.bf16.mxu0 0
    %160 = vmatpush1.bf16.msra.mxu0 0
    %161 = vmatprep.subr.bf16.mxu0 0
    %162 = vmatpush1.bf16.msra.mxu0 0
    %163 = vmatprep.subr.bf16.mxu0 0
    %164 = vmatpush1.bf16.msra.mxu0 0
    %165 = vmatprep.mubr.bf16.mxu0 0
    %166 = vmatmul.mubr.bf16.gmra.mrb[0].mxu0 %v61
    %v167 = vpop.f32.mrb[0].mxu0
    %v168 = vadd.f32 %v83, %v167
    %v169 = vpop.f32.mrb[0].mxu0
    %v170 = vpop.f32.mrb[0].mxu0
    %v171 = vpop.f32.mrb[0].mxu0
    %172 = vdwg.mxu0
    %173 = vadd.xlane.f32.xlu0 %v168
    %v174 = vpop.xlane.xlu0 %173
    %v175 = vmul.f32 %v174, 0.0078125
    %v176 = vsub.f32 %v168, %v175
    %v177 = vmul.f32 %v176, %v176
    %178 = vadd.xlane.f32.xlu0 %v177
    %v179 = vpop.xlane.xlu0 %178
    %v180 = vmul.f32 %v179, 0.0078125
    %v181 = vadd.f32 %v180, 1e-05
    %v182 = vrsqrt.pop %v181
    %v183 = vmul.f32 %v176, %v182
    %v184 = vmul.f32 %v183, 0.01
    %v185 = vmax.f32 %v183, %v184
    %v186 = vpack.c.bf16 %v185, %v185
    %v187 = vld [vmem:[#allocation7] sm:$0xf]
    %v188 = vld [vmem:[#allocation7 + $0x4] sm:$0xf]
    %v189 = vld [vmem:[#allocation7 + $0x8] sm:$0xf]
    %v190 = vld [vmem:[#allocation7 + $0xc] sm:$0xf]
    %v191 = vld [vmem:[#allocation7 + $0x10] sm:$0xf]
    %v192 = vld [vmem:[#allocation7 + $0x14] sm:$0xf]
    %v193 = vld [vmem:[#allocation7 + $0x18] sm:$0xf]
    %v194 = vld [vmem:[#allocation7 + $0x1c] sm:$0xf]
    %v195 = vld [vmem:[#allocation7 + $0x20] sm:$0xf]
    %v196 = vld [vmem:[#allocation7 + $0x24] sm:$0xf]
    %v197 = vld [vmem:[#allocation7 + $0x28] sm:$0xf]
    %v198 = vld [vmem:[#allocation7 + $0x2c] sm:$0xf]
    %v199 = vld [vmem:[#allocation7 + $0x30] sm:$0xf]
    %v200 = vld [vmem:[#allocation7 + $0x34] sm:$0xf]
    %v201 = vld [vmem:[#allocation7 + $0x38] sm:$0xf]
    %v202 = vld [vmem:[#allocation7 + $0x3c] sm:$0xf]
    %v203 = vld [vmem:[%s4] sm:$0x1]
    %v205 = vlaneseq
    %v206 = vshrl.u32 %v205, 7
    %v207 = vsub.s32 0, %v206
    %v208 = vrot.slane %v203, %v207
    %v226 = vunpack.c.l.b16 %v187
    %v227 = vunpack.c.l.b16 %v188
    %v228 = vunpack.c.l.b16 %v189
    %v229 = vunpack.c.l.b16 %v190
    %v230 = vunpack.c.l.b16 %v191
    %v231 = vunpack.c.l.b16 %v192
    %v232 = vunpack.c.l.b16 %v193
    %v233 = vunpack.c.l.b16 %v194
    %v234 = vunpack.c.l.b16 %v195
    %v235 = vunpack.c.l.b16 %v196
    %v236 = vunpack.c.l.b16 %v197
    %v237 = vunpack.c.l.b16 %v198
    %v238 = vunpack.c.l.b16 %v199
    %v239 = vunpack.c.l.b16 %v200
    %v240 = vunpack.c.l.b16 %v201
    %v241 = vunpack.c.l.b16 %v202
    %v242 = vpack.c.b16 %v227, %v226
    %v243 = vpack.c.b16 %v229, %v228
    %v244 = vpack.c.b16 %v231, %v230
    %v245 = vpack.c.b16 %v233, %v232
    %v246 = vpack.c.b16 %v235, %v234
    %v247 = vpack.c.b16 %v237, %v236
    %v248 = vpack.c.b16 %v239, %v238
    %v249 = vpack.c.b16 %v241, %v240
    %258 = vmatprep.subr.bf16.mxu0 0
    %259 = vmatpush1.bf16.msra.mxu0 %v242
    %260 = vmatprep.subr.bf16.mxu0 0
    %261 = vmatpush1.bf16.msra.mxu0 %v243
    %262 = vmatprep.subr.bf16.mxu0 0
    %263 = vmatpush1.bf16.msra.mxu0 %v244
    %264 = vmatprep.subr.bf16.mxu0 0
    %265 = vmatpush1.bf16.msra.mxu0 %v245
    %266 = vmatprep.subr.bf16.mxu0 0
    %267 = vmatpush1.bf16.msra.mxu0 %v246
    %268 = vmatprep.subr.bf16.mxu0 0
    %269 = vmatpush1.bf16.msra.mxu0 %v247
    %270 = vmatprep.subr.bf16.mxu0 0
    %271 = vmatpush1.bf16.msra.mxu0 %v248
    %272 = vmatprep.subr.bf16.mxu0 0
    %273 = vmatpush1.bf16.msra.mxu0 %v249
    %274 = vmatprep.subr.bf16.mxu0 0
    %275 = vmatpush1.bf16.msra.mxu0 0
    %276 = vmatprep.subr.bf16.mxu0 0
    %277 = vmatpush1.bf16.msra.mxu0 0
    %278 = vmatprep.subr.bf16.mxu0 0
    %279 = vmatpush1.bf16.msra.mxu0 0
    %280 = vmatprep.subr.bf16.mxu0 0
    %281 = vmatpush1.bf16.msra.mxu0 0
    %282 = vmatprep.subr.bf16.mxu0 0
    %283 = vmatpush1.bf16.msra.mxu0 0
    %284 = vmatprep.subr.bf16.mxu0 0
    %285 = vmatpush1.bf16.msra.mxu0 0
    %286 = vmatprep.subr.bf16.mxu0 0
    %287 = vmatpush1.bf16.msra.mxu0 0
    %288 = vmatprep.subr.bf16.mxu0 0
    %289 = vmatpush1.bf16.msra.mxu0 0
    %290 = vmatprep.mubr.bf16.mxu0 0
    %291 = vmatmul.mubr.bf16.gmra.mrb[0].mxu0 %v186
    %v292 = vpop.f32.mrb[0].mxu0
    %v293 = vadd.f32 %v208, %v292
    %v294 = vpop.f32.mrb[0].mxu0
    %v295 = vpop.f32.mrb[0].mxu0
    %v296 = vpop.f32.mrb[0].mxu0
    %297 = vdwg.mxu0
    %298 = vadd.xlane.f32.xlu0 %v293
    %v299 = vpop.xlane.xlu0 %298
    %v300 = vmul.f32 %v299, 0.015625
    %v301 = vsub.f32 %v293, %v300
    %v302 = vlaneseq
    %v303 = vand.u32 %v302, 127
    %vm304 = vcmp.lt.s32.totalorder %v303, 64
    %v305 = vsel %vm304, 1, 0
    %vm306 = vcmp.eq.s32.totalorder %v305, 1
    %v307 = vsel %vm306, %v301, 0.0
    %v308 = vmul.f32 %v307, %v307
    %309 = vadd.xlane.f32.xlu0 %v308
    %v310 = vpop.xlane.xlu0 %309
    %v311 = vmul.f32 %v310, 0.015625
    %v312 = vadd.f32 %v311, 1e-05
    %v313 = vrsqrt.pop %v312
    %v314 = vmul.f32 %v301, %v313
    %v315 = vmul.f32 %v314, 0.01
    %v316 = vmax.f32 %v314, %v315
    %317 = vst [vmem:[#allocation8] sm:$0xff] %v316
    // Predicated region
    $region34: #{tpu_custom_call.1} parent=1 // pred_check
      _
    $region35: #{tpu_custom_call.1} parent=1 // pred_check_branch
      %319 = sbr.rel (0) target = $region37
    $region36: #{tpu_custom_call.1} parent=1 // pred_region
      %s321 = ssub.s32 128, 128
      %322 = vsyncadd [#allocation4], %s321
      %s324 = sshll.u32 [#allocation8], 4
      %s325 = int_to_ptr.vmem [resolvable:$true] %s324
      %327 = dma.vmem_to_hbm [thread:$0]  %s325, 128, %s5, [#allocation4]
    $region37: #{tpu_custom_call.1} parent=1 // pred_fallthru
      _
    // Predicated region
    $region38: #{tpu_custom_call.1} parent=1 // pred_check
      _
    $region39: #{tpu_custom_call.1} parent=1 // pred_check_branch
      %329 = sbr.rel (0) target = $region41
    $region40: #{tpu_custom_call.1} parent=1 // pred_region
      %330 = dma.done [#allocation4], 128
    $region41: #{tpu_custom_call.1} parent=1 // pred_fallthru
      _
    %331 = vsyncpa [#allocation3], 1
    %332 = vsyncpa [#allocation6], 1
    %333 = vsyncpa [#allocation4], 1

</llo_original>
